<compile_context>
chip_gen: v6e
topology: v6e:2x2x1
jax: 0.10.0
libtpu: 0.0.40
codegen_flags: <defaults>
</compile_context>

<pallas_src>
import functools

import jax
import jax.numpy as jnp
from jax import lax
from jax.experimental import pallas as pl
from jax.experimental.pallas import tpu as pltpu


LN_EPS = 1e-6

# VMEM sizing (bytes).  48 MiB is a safe scoped target on every generation:
# v7x has 64 MiB physical per TensorCore (32 MiB scoped default); v5e/v6e have
# 128 MiB physical.  Activation tiles are capped at 8 MiB so the
# double-buffered stream plus the (double-buffered) weight blocks fit.
_VMEM_BUDGET = 48 << 20
_ACT_TILE_CAP = 8 << 20
_SUBLANES = {4: 8, 2: 16, 1: 32}   # sublane padding multiple per element size


def _round_up(v, m):
    return (v + m - 1) // m * m


def _cls_kernel(x_ref, w_fe_ref, aff_ref, w_top_ref, b_top_ref, out_ref,
                acc_ref, *, inv_p):
    # x_ref:     [tn, C, tp]   activation tile (H*W on the lane axis)
    # w_fe_ref:  [C, F]        synthetic-backbone 1x1 conv weight ([C, F] layout)
    # aff_ref:   [3, F]        rows: conv bias, LayerNorm gamma, LayerNorm beta
    # w_top_ref: [F, Kpad]     top Linear weight (transposed, lane-padded)
    # b_top_ref: [1, Kpad]
    # out_ref:   [tn, Kpad]    logits (padded); resident across the spatial axis
    # acc_ref:   [tn, C] f32   pooling partial-sum accumulator (VMEM scratch)
    p = pl.program_id(1)

    @pl.when(p == 0)
    def _():
        acc_ref[...] = jnp.zeros_like(acc_ref)

    # Partial spatial sum for global average pooling.  The (optional) bf16->f32
    # cast is folded into the cross-lane reduction; the XLU reduce slot is free
    # for this HBM-bound loop.
    acc_ref[...] += jnp.sum(x_ref[...], axis=-1, dtype=jnp.float32)

    @pl.when(p == pl.num_programs(1) - 1)
    def _():
        pooled = acc_ref[...] * inv_p                  # [tn, C]  mean over H*W

        b_fe = aff_ref[pl.ds(0, 1), :]
        gamma = aff_ref[pl.ds(1, 1), :]
        beta = aff_ref[pl.ds(2, 1), :]

        # Backbone 1x1 conv (matmul) on the pooled features.
        feat = jnp.dot(pooled, w_fe_ref[...],
                       preferred_element_type=jnp.float32) + b_fe

        # LayerNorm2d over the feature/channel dim (biased var, eps=1e-6).
        mu = jnp.mean(feat, axis=-1, keepdims=True)
        diff = feat - mu
        var = jnp.mean(diff * diff, axis=-1, keepdims=True)
        normed = diff * lax.rsqrt(var + LN_EPS)
        normed = normed * gamma + beta

        # Flatten(1) is a no-op (1x1 spatial) -> classifier.top_layer Linear.
        logits = jnp.dot(normed, w_top_ref[...],
                         preferred_element_type=jnp.float32) + b_top_ref[...]
        out_ref[...] = logits.astype(out_ref.dtype)


def _pick_batch_tile(n_pad):
    # n_pad is a multiple of 8.  Prefer >= 2 programs on the (parallel) batch
    # axis so both TensorCores of a v7x part get work; otherwise the largest
    # multiple-of-8 divisor <= 128.
    divisors = [t for t in (128, 64, 32, 16, 8) if n_pad % t == 0]
    for t in divisors:
        if n_pad // t >= 2:
            return t
    return divisors[0]


def _pick_spatial_tile(p_pad, tn, c_pad, elem_bytes, max_bytes):
    # Largest lane-aligned (multiple of 128) divisor of the padded spatial
    # extent whose tile footprint — with the channel dim rounded up to the
    # sublane multiple — stays under the per-buffer cap (double-buffered).
    best = 128
    for k in range(1, p_pad // 128 + 1):
        if p_pad % k:
            continue
        tp = p_pad // k
        if tp % 128:
            continue
        if tn * c_pad * tp * elem_bytes <= max_bytes:
            return tp
    return best


def classification_model_forward(x_nchw, params):
    """x_nchw: [N, C, H, W] float32/bfloat16 (PyTorch layout). Returns [N, K] f32."""
    n, c, h, w = x_nchw.shape
    p_total = h * w

    # Free reshape of the contiguous NCHW tensor; no transpose, H*W on lanes.
    x = x_nchw.reshape(n, c, p_total)

    # Robustness padding: spatial -> multiple of 128 (zeros add 0 to the sum,
    # inv_p uses the true H*W); batch -> multiple of 8 (sublane-aligned logits
    # store, always a legal multiple-of-8 batch tile).  Padded rows sliced off.
    n_pad = _round_up(n, 8)
    p_pad = _round_up(p_total, 128)
    if n_pad != n or p_pad != p_total:
        x = jnp.pad(x, ((0, n_pad - n), (0, 0), (0, p_pad - p_total)))

    w_fe, b_fe, gamma, beta, w_top, b_top = (
        params["w_fe"], params["b_fe"], params["gamma"],
        params["beta"], params["w_top"], params["b_top"])
    f = w_fe.shape[1]
    k = w_top.shape[1]

    # Lane-pad the classifier head so the logits store is lane-dense (no masked
    # vst); padded columns are exactly zero and sliced off below.
    k_pad = max(128, _round_up(k, 128))
    if k_pad != k:
        w_top = jnp.pad(w_top, ((0, 0), (0, k_pad - k)))
        b_top = jnp.pad(b_top, ((0, 0), (0, k_pad - k)))

    # Fuse the three [1, F] vectors into one [3, F] block: one DMA / one
    # double-buffer instead of three.
    aff = jnp.concatenate([b_fe, gamma, beta], axis=0)

    tn = _pick_batch_tile(n_pad)

    elem = jnp.dtype(x.dtype).itemsize
    c_pad = _round_up(c, _SUBLANES.get(elem, 8))   # sublane padding of the C dim

    # Resident VMEM: weight/output blocks are double-buffered by the pipeline
    # even though constant index_maps elide the repeated DMAs.  (They could be
    # single-buffered via pipeline_mode=pl.Buffered(1); instead we account for
    # them when sizing the activation tile, which is the part that matters.)
    resident = (
        2 * (_round_up(c, 8) * _round_up(f, 128) * 4          # w_fe
             + 8 * _round_up(f, 128) * 4                      # fused affine
             + _round_up(f, 8) * k_pad * 4                    # w_top
             + 8 * k_pad * 4)                                 # b_top
        + 2 * _round_up(tn, 8) * k_pad * 4                    # logits block
        + _round_up(tn, 8) * _round_up(c, 128) * 4)           # acc scratch
    act_budget = max(1 << 20, _VMEM_BUDGET - resident - (4 << 20))
    tile_cap = max(256 << 10, min(_ACT_TILE_CAP, act_budget // 2))
    tp = _pick_spatial_tile(p_pad, tn, c_pad, elem, tile_cap)

    act_bytes = tn * c_pad * tp * elem
    vmem_limit = int(min(max(resident + 2 * act_bytes + (4 << 20), 32 << 20),
                         _VMEM_BUDGET))

    grid = (n_pad // tn, p_pad // tp)     # spatial (reduction) axis innermost
    const = lambda i, j: (0, 0)           # weights resident across the grid

    grid_spec = pltpu.PrefetchScalarGridSpec(
        num_scalar_prefetch=0,
        grid=grid,
        in_specs=[
            pl.BlockSpec((tn, c, tp), lambda i, j: (i, 0, j)),   # activations
            pl.BlockSpec((c, f), const),                         # w_fe
            pl.BlockSpec((3, f), const),                         # fused affine
            pl.BlockSpec((f, k_pad), const),                     # w_top (pad)
            pl.BlockSpec((1, k_pad), const),                     # b_top (pad)
        ],
        out_specs=pl.BlockSpec((tn, k_pad), lambda i, j: (i, 0)),
        scratch_shapes=[pltpu.VMEM((tn, c), jnp.float32)],
    )

    out = pl.pallas_call(
        functools.partial(_cls_kernel, inv_p=1.0 / float(p_total)),
        out_shape=jax.ShapeDtypeStruct((n_pad, k_pad), jnp.float32),
        grid_spec=grid_spec,
        compiler_params=pltpu.CompilerParams(
            dimension_semantics=("parallel", "arbitrary"),
            vmem_limit_bytes=vmem_limit),
    )(x, w_fe, aff, w_top, b_top)

    return out[:n, :k]


def init_params(key, in_channels, num_ftrs, num_classes):
    k_fe, k_top = jax.random.split(key)
    # Synthetic backbone conv weight (1x1 conv == matmul [C, F]).
    w_fe = (jax.random.normal(k_fe, (in_channels, num_ftrs), jnp.float32)
            * (1.0 / jnp.sqrt(in_channels)))
    b_fe = jnp.zeros((1, num_ftrs), jnp.float32)
    # LayerNorm defaults: weight=1, bias=0.
    gamma = jnp.ones((1, num_ftrs), jnp.float32)
    beta = jnp.zeros((1, num_ftrs), jnp.float32)
    # classifier.top_layer: trunc_normal_(std=0.02), bias zeros (per __init__).
    w_top = (jax.random.truncated_normal(
        k_top, -2.0, 2.0, (num_ftrs, num_classes), jnp.float32) * 0.02)
    b_top = jnp.zeros((1, num_classes), jnp.float32)
    return {"w_fe": w_fe, "b_fe": b_fe, "gamma": gamma, "beta": beta,
            "w_top": w_top, "b_top": b_top}


def _reference(x_nchw, params):
    # Pure-JAX reference for the sanity check (same math as the kernel).
    n, c, h, w = x_nchw.shape
    pooled = jnp.mean(x_nchw.astype(jnp.float32).reshape(n, c, h * w), axis=-1)
    feat = jnp.dot(pooled, params["w_fe"],
                   precision=lax.Precision.HIGHEST) + params["b_fe"]
    mu = jnp.mean(feat, axis=-1, keepdims=True)
    var = jnp.mean((feat - mu) ** 2, axis=-1, keepdims=True)
    normed = (feat - mu) / jnp.sqrt(var + LN_EPS)
    normed = normed * params["gamma"] + params["beta"]
    return jnp.dot(normed, params["w_top"],
                   precision=lax.Precision.HIGHEST) + params["b_top"]


if __name__ == "__main__":
    # Small shapes consistent with the forward pass.
    N, C, H, W = 2, 4, 16, 16
    NUM_FTRS, NUM_CLASSES = 256, 8

    key = jax.random.PRNGKey(0)
    k_x, k_p = jax.random.split(key)
    x = jax.random.normal(k_x, (N, C, H, W), jnp.float32)
    params = init_params(k_p, C, NUM_FTRS, NUM_CLASSES)

    logits = classification_model_forward(x, params)
    jax.block_until_ready(logits)

    ref = _reference(x, params)
    assert logits.shape == (N, NUM_CLASSES)
    assert jnp.allclose(logits, ref, atol=1e-4, rtol=1e-4)

    # bf16 activations halve the HBM stream (the kernel upcasts to f32 inside).
    x_bf16 = x.astype(jnp.bfloat16)
    logits_bf16 = classification_model_forward(x_bf16, params)
    jax.block_until_ready(logits_bf16)
    ref_bf16 = _reference(x_bf16, params)
    assert logits_bf16.shape == (N, NUM_CLASSES)
    assert jnp.allclose(logits_bf16, ref_bf16, atol=1e-3, rtol=1e-2)

    print("KERNEL_OK")
</pallas_src>

<mosaic_0001>
module attributes {stable_mosaic.version = 11 : i64} {
  func.func @_cls_kernel(%arg0: i32, %arg1: i32, %arg2: memref<8x4x256xf32, #tpu.memory_space<vmem>>, %arg3: memref<4x256xf32, #tpu.memory_space<vmem>>, %arg4: memref<3x256xf32, #tpu.memory_space<vmem>>, %arg5: memref<256x128xf32, #tpu.memory_space<vmem>>, %arg6: memref<1x128xf32, #tpu.memory_space<vmem>>, %arg7: memref<8x128xf32, #tpu.memory_space<vmem>>, %arg8: memref<8x4xf32, #tpu.memory_space<vmem>>) attributes {dimension_semantics = [#tpu.dimension_semantics<parallel>, #tpu.dimension_semantics<arbitrary>], iteration_bounds = array<i64: 1, 1>, scalar_prefetch = 0 : i64, scratch_operands = 1 : i64, tpu.core_type = #tpu.core_type<tc>, window_params = [{transform_indices = @transform_0, window_bounds = array<i64: 8, 4, 256>}, {pipeline_mode = #tpu.pipeline_mode<synchronous>, transform_indices = @transform_1, window_bounds = array<i64: 4, 256>}, {pipeline_mode = #tpu.pipeline_mode<synchronous>, transform_indices = @transform_2, window_bounds = array<i64: 3, 256>}, {pipeline_mode = #tpu.pipeline_mode<synchronous>, transform_indices = @transform_3, window_bounds = array<i64: 256, 128>}, {pipeline_mode = #tpu.pipeline_mode<synchronous>, transform_indices = @transform_4, window_bounds = array<i64: 1, 128>}, {transform_indices = @transform_5, window_bounds = array<i64: 8, 128>}]} {
    %c0_i32 = arith.constant 0 : i32
    %0 = arith.cmpi eq, %arg1, %c0_i32 : i32
    %1 = arith.extui %0 : i1 to i32
    %c0_i32_0 = arith.constant 0 : i32
    %2 = arith.cmpi ne, %1, %c0_i32_0 : i32
    scf.if %2 {
      %cst_9 = arith.constant 0.000000e+00 : f32
      %11 = vector.broadcast %cst_9 : f32 to vector<8x4xf32>
      %c0_10 = arith.constant 0 : index
      %c0_11 = arith.constant 0 : index
      %12 = vector.load %arg8[%c0_10, %c0_11] : memref<8x4xf32, #tpu.memory_space<vmem>>, vector<8x4xf32>
      tpu.vector_store %arg8[%c0_10, %c0_11], %11 {strides = array<i32>} : memref<8x4xf32, #tpu.memory_space<vmem>>, vector<8x4xf32>,
    } else {
    }
    %c0 = arith.constant 0 : index
    %c0_1 = arith.constant 0 : index
    %3 = vector.load %arg8[%c0, %c0_1] : memref<8x4xf32, #tpu.memory_space<vmem>>, vector<8x4xf32>
    %c0_2 = arith.constant 0 : index
    %c0_3 = arith.constant 0 : index
    %c0_4 = arith.constant 0 : index
    %4 = vector.load %arg2[%c0_2, %c0_3, %c0_4] : memref<8x4x256xf32, #tpu.memory_space<vmem>>, vector<8x4x256xf32>
    %cst = arith.constant dense<0.000000e+00> : vector<8x4xf32>
    %5 = vector.multi_reduction <add>, %4, %cst [2] : vector<8x4x256xf32> to vector<8x4xf32>
    %6 = arith.addf %3, %5 : vector<8x4xf32>
    %c0_5 = arith.constant 0 : index
    %c0_6 = arith.constant 0 : index
    %7 = vector.load %arg8[%c0_5, %c0_6] : memref<8x4xf32, #tpu.memory_space<vmem>>, vector<8x4xf32>
    tpu.vector_store %arg8[%c0_5, %c0_6], %6 {strides = array<i32>} : memref<8x4xf32, #tpu.memory_space<vmem>>, vector<8x4xf32>,
    %c0_i32_7 = arith.constant 0 : i32
    %8 = arith.cmpi eq, %arg1, %c0_i32_7 : i32
    %9 = arith.extui %8 : i1 to i32
    %c0_i32_8 = arith.constant 0 : i32
    %10 = arith.cmpi ne, %9, %c0_i32_8 : i32
    scf.if %10 {
      %c0_9 = arith.constant 0 : index
      %c0_10 = arith.constant 0 : index
      %11 = vector.load %arg8[%c0_9, %c0_10] : memref<8x4xf32, #tpu.memory_space<vmem>>, vector<8x4xf32>
      %cst_11 = arith.constant 3.906250e-03 : f32
      %12 = vector.broadcast %cst_11 : f32 to vector<8x4xf32>
      %13 = arith.mulf %11, %12 : vector<8x4xf32>
      %c0_12 = arith.constant 0 : index
      %c0_13 = arith.constant 0 : index
      %14 = vector.load %arg4[%c0_12, %c0_13] : memref<3x256xf32, #tpu.memory_space<vmem>>, vector<1x256xf32>
      %c1 = arith.constant 1 : index
      %c0_14 = arith.constant 0 : index
      %15 = vector.load %arg4[%c1, %c0_14] : memref<3x256xf32, #tpu.memory_space<vmem>>, vector<1x256xf32>
      %c2 = arith.constant 2 : index
      %c0_15 = arith.constant 0 : index
      %16 = vector.load %arg4[%c2, %c0_15] : memref<3x256xf32, #tpu.memory_space<vmem>>, vector<1x256xf32>
      %c0_16 = arith.constant 0 : index
      %c0_17 = arith.constant 0 : index
      %17 = vector.load %arg3[%c0_16, %c0_17] : memref<4x256xf32, #tpu.memory_space<vmem>>, vector<4x256xf32>
      %cst_18 = arith.constant dense<0.000000e+00> : vector<8x256xf32>
      %18 = tpu.matmul %13, %17, %cst_18 {dimension_numbers = #tpu.dot_dimension_numbers<[1], [0], [0], [1], [0, 0, 1, 1], [], []>} : vector<8x4xf32>, vector<4x256xf32>, vector<8x256xf32> -> vector<8x256xf32>
      %19 = vector.broadcast %14 : vector<1x256xf32> to vector<8x256xf32>
      %20 = arith.addf %18, %19 : vector<8x256xf32>
      %cst_19 = arith.constant dense<0.000000e+00> : vector<8xf32>
      %21 = vector.multi_reduction <add>, %20, %cst_19 [1] : vector<8x256xf32> to vector<8xf32>
      %22 = vector.shape_cast %21 : vector<8xf32> to vector<8x1xf32>
      %cst_20 = arith.constant 2.560000e+02 : f32
      %23 = vector.broadcast %cst_20 : f32 to vector<8x1xf32>
      %24 = arith.divf %22, %23 : vector<8x1xf32>
      %25 = vector.broadcast %24 : vector<8x1xf32> to vector<8x256xf32>
      %26 = arith.subf %20, %25 : vector<8x256xf32>
      %27 = arith.mulf %26, %26 : vector<8x256xf32>
      %cst_21 = arith.constant dense<0.000000e+00> : vector<8xf32>
      %28 = vector.multi_reduction <add>, %27, %cst_21 [1] : vector<8x256xf32> to vector<8xf32>
      %29 = vector.shape_cast %28 : vector<8xf32> to vector<8x1xf32>
      %cst_22 = arith.constant 2.560000e+02 : f32
      %30 = vector.broadcast %cst_22 : f32 to vector<8x1xf32>
      %31 = arith.divf %29, %30 : vector<8x1xf32>
      %cst_23 = arith.constant 9.99999997E-7 : f32
      %32 = vector.broadcast %cst_23 : f32 to vector<8x1xf32>
      %33 = arith.addf %31, %32 : vector<8x1xf32>
      %34 = math.rsqrt %33 : vector<8x1xf32>
      %35 = vector.broadcast %34 : vector<8x1xf32> to vector<8x256xf32>
      %36 = arith.mulf %26, %35 : vector<8x256xf32>
      %37 = vector.broadcast %15 : vector<1x256xf32> to vector<8x256xf32>
      %38 = arith.mulf %36, %37 : vector<8x256xf32>
      %39 = vector.broadcast %16 : vector<1x256xf32> to vector<8x256xf32>
      %40 = arith.addf %38, %39 : vector<8x256xf32>
      %c0_24 = arith.constant 0 : index
      %c0_25 = arith.constant 0 : index
      %41 = vector.load %arg5[%c0_24, %c0_25] : memref<256x128xf32, #tpu.memory_space<vmem>>, vector<256x128xf32>
      %cst_26 = arith.constant dense<0.000000e+00> : vector<8x128xf32>
      %42 = tpu.matmul %40, %41, %cst_26 {dimension_numbers = #tpu.dot_dimension_numbers<[1], [0], [0], [1], [0, 0, 1, 1], [], []>} : vector<8x256xf32>, vector<256x128xf32>, vector<8x128xf32> -> vector<8x128xf32>
      %c0_27 = arith.constant 0 : index
      %c0_28 = arith.constant 0 : index
      %43 = vector.load %arg6[%c0_27, %c0_28] : memref<1x128xf32, #tpu.memory_space<vmem>>, vector<1x128xf32>
      %44 = vector.broadcast %43 : vector<1x128xf32> to vector<8x128xf32>
      %45 = arith.addf %42, %44 : vector<8x128xf32>
      %c0_29 = arith.constant 0 : index
      %c0_30 = arith.constant 0 : index
      %46 = vector.load %arg7[%c0_29, %c0_30] : memref<8x128xf32, #tpu.memory_space<vmem>>, vector<8x128xf32>
      tpu.vector_store %arg7[%c0_29, %c0_30], %45 {strides = array<i32>} : memref<8x128xf32, #tpu.memory_space<vmem>>, vector<8x128xf32>,
    } else {
    }
    return
  }
  func.func @transform_0(%arg0: i32, %arg1: i32) -> (i32, i32, i32) {
    %c0_i32 = arith.constant 0 : i32
    %c0_i32_0 = arith.constant 0 : i32
    return %arg0, %c0_i32, %arg1 : i32, i32, i32
  }
  func.func @transform_1(%arg0: i32, %arg1: i32) -> (i32, i32) {
    %c0_i32 = arith.constant 0 : i32
    %c0_i32_0 = arith.constant 0 : i32
    %c0_i32_1 = arith.constant 0 : i32
    return %c0_i32, %c0_i32_0 : i32, i32
  }
  func.func @transform_2(%arg0: i32, %arg1: i32) -> (i32, i32) {
    %c0_i32 = arith.constant 0 : i32
    %c0_i32_0 = arith.constant 0 : i32
    %c0_i32_1 = arith.constant 0 : i32
    return %c0_i32, %c0_i32_0 : i32, i32
  }
  func.func @transform_3(%arg0: i32, %arg1: i32) -> (i32, i32) {
    %c0_i32 = arith.constant 0 : i32
    %c0_i32_0 = arith.constant 0 : i32
    %c0_i32_1 = arith.constant 0 : i32
    return %c0_i32, %c0_i32_0 : i32, i32
  }
  func.func @transform_4(%arg0: i32, %arg1: i32) -> (i32, i32) {
    %c0_i32 = arith.constant 0 : i32
    %c0_i32_0 = arith.constant 0 : i32
    %c0_i32_1 = arith.constant 0 : i32
    return %c0_i32, %c0_i32_0 : i32, i32
  }
  func.func @transform_5(%arg0: i32, %arg1: i32) -> (i32, i32) {
    %c0_i32 = arith.constant 0 : i32
    %c0_i32_0 = arith.constant 0 : i32
    return %arg0, %c0_i32 : i32, i32
  }
}

</mosaic_0001>

<llo_original>
// kernel: tpu_custom_call.1
$region0: #{tpu_custom_call.1}
  #allocation0 [shape = 'u32[]', space=smem, size = 0x4, offset = 0x4, fixed_abs, tag = 'smem constant byte address 0x4 - core index']
  #allocation1 [shape = 'u32[144,128]{1,0:T(1,128)}', space=vmem, size = 0x12000, scoped, tag = 'internal scratch']
  #allocation2 [shape = 'f32[8,4]{1,0:T(8,128)}', space=vmem, size = 0x1000, scoped, tag = 'scratch operand']
  %s0 = inlined_call_operand.hbm [shape: f32[8,4,256], index: 0, kind: input, shape index: {}]
  %s1 = inlined_call_operand.hbm [shape: f32[4,256], index: 1, kind: input, shape index: {}]
  %s2 = inlined_call_operand.hbm [shape: f32[3,256], index: 2, kind: input, shape index: {}]
  %s3 = inlined_call_operand.hbm [shape: f32[256,128], index: 3, kind: input, shape index: {}]
  %s4 = inlined_call_operand.vmem [shape: f32[1,128], index: 4, kind: input, shape index: {}]
  %s5 = inlined_call_operand.hbm [shape: f32[8,128], index: 5, kind: output, shape index: {}]
  %s6 = sld [smem:[#allocation0]]
  $region54: #{tpu_custom_call.1} parent=0
    _
  %s8 = ssub.s32 1, %s6
  %s9 = scalar_select 0, %s8, %s6
  $region1: #{tpu_custom_call.1} parent=0
    #allocation3 [shape = 'u8[32768]{0}', space=vmem, size = 0x8000, scoped, tag = 'input window, operand 0, single buffered']
    #allocation4 [shape = 's32[1]{0}', space=sflag, size = 0x4, scoped, tag = 'scoped memory for tpu_custom_call.1']
    #allocation5 [shape = 's32[1]{0}', space=sflag, size = 0x4, scoped, tag = 'scoped memory for tpu_custom_call.1']
    #allocation6 [shape = 'u8[4096]{0}', space=vmem, size = 0x1000, scoped, tag = 'input window, operand 1, single buffered']
    #allocation7 [shape = 's32[1]{0}', space=sflag, size = 0x4, scoped, tag = 'scoped memory for tpu_custom_call.1']
    #allocation8 [shape = 'u8[4096]{0}', space=vmem, size = 0x1000, scoped, tag = 'input window, operand 2, single buffered']
    #allocation9 [shape = 'u8[131072]{0}', space=vmem, size = 0x20000, scoped, tag = 'input window, operand 3, single buffered']
    #allocation10 [shape = 's32[1]{0}', space=sflag, size = 0x4, scoped, tag = 'scoped memory for tpu_custom_call.1']
    #allocation11 [shape = 'u8[4096]{0}', space=vmem, size = 0x1000, scoped, tag = 'output window, operand 0, single buffered']
    %10 = vsyncpa [#allocation4], 0
    %11 = vsyncpa [#allocation7], 0
    %12 = vsyncpa [#allocation10], 0
    %13 = vsyncpa [#allocation5], 0
    // Predicated region
    $region2: #{tpu_custom_call.1} parent=1 // pred_check
      _
    $region3: #{tpu_custom_call.1} parent=1 // pred_check_branch
      %15 = sbr.rel (0) target = $region5
    $region4: #{tpu_custom_call.1} parent=1 // pred_region
      %s17 = ssub.s32 1024, 1024
      %18 = vsyncadd [#allocation4], %s17
      %s19 = sshll.u32 [#allocation3], 4
      %s20 = int_to_ptr.vmem [resolvable:$true] %s19
      %25 = dma.hbm_to_vmem [thread:$0]  %s0, 1024, %s20, [#allocation4], 128, 128, 8
    $region5: #{tpu_custom_call.1} parent=1 // pred_fallthru
      _
    // Predicated region
    $region6: #{tpu_custom_call.1} parent=1 // pred_check
      _
    $region7: #{tpu_custom_call.1} parent=1 // pred_check_branch
      %27 = sbr.rel (0) target = $region9
    $region8: #{tpu_custom_call.1} parent=1 // pred_region
      %s29 = ssub.s32 128, 128
      %30 = vsyncadd [#allocation7], %s29
      %s32 = sshll.u32 [#allocation6], 4
      %s33 = int_to_ptr.vmem [resolvable:$true] %s32
      %35 = dma.hbm_to_vmem [thread:$0]  %s1, 128, %s33, [#allocation7]
    $region9: #{tpu_custom_call.1} parent=1 // pred_fallthru
      _
    // Predicated region
    $region10: #{tpu_custom_call.1} parent=1 // pred_check
      _
    $region11: #{tpu_custom_call.1} parent=1 // pred_check_branch
      %37 = sbr.rel (0) target = $region13
    $region12: #{tpu_custom_call.1} parent=1 // pred_region
      %s39 = ssub.s32 128, 128
      %40 = vsyncadd [#allocation7], %s39
      %s42 = sshll.u32 [#allocation8], 4
      %s43 = int_to_ptr.vmem [resolvable:$true] %s42
      %45 = dma.hbm_to_vmem [thread:$0]  %s2, 128, %s43, [#allocation7]
    $region13: #{tpu_custom_call.1} parent=1 // pred_fallthru
      _
    // Predicated region
    $region14: #{tpu_custom_call.1} parent=1 // pred_check
      _
    $region15: #{tpu_custom_call.1} parent=1 // pred_check_branch
      %47 = sbr.rel (0) target = $region17
    $region16: #{tpu_custom_call.1} parent=1 // pred_region
      %s49 = ssub.s32 4096, 4096
      %50 = vsyncadd [#allocation10], %s49
      %s51 = sshll.u32 [#allocation9], 4
      %s52 = int_to_ptr.vmem [resolvable:$true] %s51
      %57 = dma.hbm_to_vmem [thread:$0]  %s3, 4096, %s52, [#allocation10], 128, 128, 8
    $region17: #{tpu_custom_call.1} parent=1 // pred_fallthru
      _
    // Predicated region
    $region18: #{tpu_custom_call.1} parent=1 // pred_check
      _
    $region19: #{tpu_custom_call.1} parent=1 // pred_check_branch
      %59 = sbr.rel (0) target = $region21
    $region20: #{tpu_custom_call.1} parent=1 // pred_region
      _
    $region21: #{tpu_custom_call.1} parent=1 // pred_fallthru
      _
    // Predicated region
    $region22: #{tpu_custom_call.1} parent=1 // pred_check
      _
    $region23: #{tpu_custom_call.1} parent=1 // pred_check_branch
      %61 = sbr.rel (0) target = $region25
    $region24: #{tpu_custom_call.1} parent=1 // pred_region
      %62 = dma.done [#allocation4], 1024
    $region25: #{tpu_custom_call.1} parent=1 // pred_fallthru
      _
    // Predicated region
    $region26: #{tpu_custom_call.1} parent=1 // pred_check
      _
    $region27: #{tpu_custom_call.1} parent=1 // pred_check_branch
      %64 = sbr.rel (0) target = $region29
    $region28: #{tpu_custom_call.1} parent=1 // pred_region
      %65 = dma.done [#allocation7], 128
    $region29: #{tpu_custom_call.1} parent=1 // pred_fallthru
      _
    // Predicated region
    $region30: #{tpu_custom_call.1} parent=1 // pred_check
      _
    $region31: #{tpu_custom_call.1} parent=1 // pred_check_branch
      %67 = sbr.rel (0) target = $region33
    $region32: #{tpu_custom_call.1} parent=1 // pred_region
      %68 = dma.done [#allocation7], 128
    $region33: #{tpu_custom_call.1} parent=1 // pred_fallthru
      _
    // Predicated region
    $region34: #{tpu_custom_call.1} parent=1 // pred_check
      _
    $region35: #{tpu_custom_call.1} parent=1 // pred_check_branch
      %70 = sbr.rel (0) target = $region37
    $region36: #{tpu_custom_call.1} parent=1 // pred_region
      %71 = dma.done [#allocation10], 4096
    $region37: #{tpu_custom_call.1} parent=1 // pred_fallthru
      _
    %p72 = scmp.eq.s32.totalorder 0, 0
    // Predicated region
    $region38: #{tpu_custom_call.1} parent=1 // pred_check
      %p73 = pneg %p72
    $region39: #{tpu_custom_call.1} parent=1 // pred_check_branch
      %75 = sbr.rel (%p73) target = $region41
    $region40: #{tpu_custom_call.1} parent=1 // pred_region
      %vm76 = vcmask 31744
      %77 = vst.msk [vmem:[#allocation2] sm:$0xff] %vm76, 0.0
    $region41: #{tpu_custom_call.1} parent=1 // pred_fallthru
      _
    %v78 = vld [vmem:[#allocation2] sm:$0xff]
    %v79 = vld [vmem:[#allocation3] sm:$0xff]
    %v80 = vld [vmem:[#allocation3 + $0x8] sm:$0xff]
    %v81 = vld [vmem:[#allocation3 + $0x10] sm:$0xff]
    %v82 = vld [vmem:[#allocation3 + $0x18] sm:$0xff]
    %v83 = vld [vmem:[#allocation3 + $0x20] sm:$0xff]
    %v84 = vld [vmem:[#allocation3 + $0x28] sm:$0xff]
    %v85 = vld [vmem:[#allocation3 + $0x30] sm:$0xff]
    %v86 = vld [vmem:[#allocation3 + $0x38] sm:$0xff]
    %v95 = vcombine.high %v79, %v79
    %v96 = vcombine.high %v80, %v80
    %v97 = vcombine.high %v81, %v81
    %v98 = vcombine.high %v82, %v82
    %v99 = vcombine.high %v83, %v83
    %v100 = vcombine.high %v84, %v84
    %v101 = vcombine.high %v85, %v85
    %v102 = vcombine.high %v86, %v86
    %vm111 = vcmask 1043456
    %v112 = vsel %vm111, %v79, 0.0
    %v113 = vsel %vm111, %v95, 0.0
    %v114 = vadd.f32 %v112, %v113
    %115 = vadd.xlane.f32.xlu0 %v114
    %v116 = vpop.xlane.xlu0 %115
    %v117 = vsel %vm111, %v80, 0.0
    %v118 = vsel %vm111, %v96, 0.0
    %v119 = vadd.f32 %v117, %v118
    %120 = vadd.xlane.f32.xlu0 %v119
    %v121 = vpop.xlane.xlu0 %120
    %v122 = vsel %vm111, %v81, 0.0
    %v123 = vsel %vm111, %v97, 0.0
    %v124 = vadd.f32 %v122, %v123
    %125 = vadd.xlane.f32.xlu0 %v124
    %v126 = vpop.xlane.xlu0 %125
    %v127 = vsel %vm111, %v82, 0.0
    %v128 = vsel %vm111, %v98, 0.0
    %v129 = vadd.f32 %v127, %v128
    %130 = vadd.xlane.f32.xlu0 %v129
    %v131 = vpop.xlane.xlu0 %130
    %v132 = vsel %vm111, %v83, 0.0
    %v133 = vsel %vm111, %v99, 0.0
    %v134 = vadd.f32 %v132, %v133
    %135 = vadd.xlane.f32.xlu0 %v134
    %v136 = vpop.xlane.xlu0 %135
    %v137 = vsel %vm111, %v84, 0.0
    %v138 = vsel %vm111, %v100, 0.0
    %v139 = vadd.f32 %v137, %v138
    %140 = vadd.xlane.f32.xlu0 %v139
    %v141 = vpop.xlane.xlu0 %140
    %v142 = vsel %vm111, %v85, 0.0
    %v143 = vsel %vm111, %v101, 0.0
    %v144 = vadd.f32 %v142, %v143
    %145 = vadd.xlane.f32.xlu0 %v144
    %v146 = vpop.xlane.xlu0 %145
    %v147 = vsel %vm111, %v86, 0.0
    %v148 = vsel %vm111, %v102, 0.0
    %v149 = vadd.f32 %v147, %v148
    %150 = vadd.xlane.f32.xlu0 %v149
    %v151 = vpop.xlane.xlu0 %150
    %v160 = vlaneseq
    %v161 = vand.u32 %v160, 127
    %v162 = vlaneseq
    %v163 = vshrl.u32 %v162, 7
    %v164 = vsub.s32 %v161, %v163
    %v165 = vrot.slane %v116, %v164
    %v166 = vlaneseq
    %v167 = vshrl.u32 %v166, 7
    %v168 = vsub.s32 %v161, %v167
    %v169 = vrot.slane %v121, %v168
    %v170 = vlaneseq
    %v171 = vshrl.u32 %v170, 7
    %v172 = vsub.s32 %v161, %v171
    %v173 = vrot.slane %v126, %v172
    %v174 = vlaneseq
    %v175 = vshrl.u32 %v174, 7
    %v176 = vsub.s32 %v161, %v175
    %v177 = vrot.slane %v131, %v176
    %v178 = vlaneseq
    %v179 = vshrl.u32 %v178, 7
    %v180 = vsub.s32 %v161, %v179
    %v181 = vrot.slane %v136, %v180
    %v182 = vlaneseq
    %v183 = vshrl.u32 %v182, 7
    %v184 = vsub.s32 %v161, %v183
    %v185 = vrot.slane %v141, %v184
    %v186 = vlaneseq
    %v187 = vshrl.u32 %v186, 7
    %v188 = vsub.s32 %v161, %v187
    %v189 = vrot.slane %v146, %v188
    %v190 = vlaneseq
    %v191 = vshrl.u32 %v190, 7
    %v192 = vsub.s32 %v161, %v191
    %v193 = vrot.slane %v151, %v192
    %vm194 = vcmask 1041409
    %v195 = vsel %vm194, %v169, %v165
    %vm196 = vcmask 1042434
    %v197 = vsel %vm196, %v173, %v195
    %vm198 = vcmask 1043459
    %v199 = vsel %vm198, %v177, %v197
    %vm200 = vcmask 1044484
    %v201 = vsel %vm200, %v181, %v199
    %vm202 = vcmask 1045509
    %v203 = vsel %vm202, %v185, %v201
    %vm204 = vcmask 1046534
    %v205 = vsel %vm204, %v189, %v203
    %vm206 = vcmask 1047559
    %v207 = vsel %vm206, %v193, %v205
    %v209 = vadd.f32 %v78, %v207
    %vm210 = vcmask 31744
    %211 = vst.msk [vmem:[#allocation2] sm:$0xff] %vm210, %v209
    // Predicated region
    $region42: #{tpu_custom_call.1} parent=1 // pred_check
      %p212 = pneg %p72
    $region43: #{tpu_custom_call.1} parent=1 // pred_check_branch
      %214 = sbr.rel (%p212) target = $region45
    $region44: #{tpu_custom_call.1} parent=1 // pred_region
      %v215 = vld [vmem:[#allocation2] sm:$0xff]
      %v216 = vmul.f32 %v215, 0.00390625
      %v217 = vld [vmem:[#allocation8] ss:$4 sm:$0x3]
      %s218 = scalar_lea.vmem [#allocation8], 1
      %v219 = vld [vmem:[%s218] ss:$4 sm:$0x3]
      %s220 = scalar_lea.vmem [#allocation8], 2
      %v221 = vld [vmem:[%s220] ss:$4 sm:$0x3]
      %v222 = vld [vmem:[#allocation6] sm:$0xff]
      %v224 = vlaneseq
      %v225 = vshrl.u32 %v224, 7
      %v226 = vsub.s32 0, %v225
      %v227 = vrot.slane %v217, %v226
      %v228 = vlaneseq
      %v229 = vshrl.u32 %v228, 7
      %v230 = vsub.s32 1, %v229
      %v231 = vrot.slane %v217, %v230
      %v235 = vcombine.high %v222, %v222
      %v237 = vsel %vm210, %v216, 0
      %v239 = vsel %vm111, %v222, 0
      %v241 = vsel %vm111, %v235, 0
      %243 = vmatprep.subr.mxu0 0.0
      %244 = vmatpush1.msra.mxu0 0.0
      %245 = vmatprep.subr.mxu0 0.0
      %246 = vmatpush1.msra.mxu0 0.0
      %247 = vmatprep.subr.mxu0 0.0
      %248 = vmatpush1.msra.mxu0 0.0
      %249 = vmatprep.subr.mxu0 0.0
      %250 = vmatpush1.msra.mxu0 0.0
      %251 = vmatprep.subr.mxu0 0.0
      %252 = vmatpush1.msra.mxu0 0.0
      %253 = vmatprep.subr.mxu0 0.0
      %254 = vmatpush1.msra.mxu0 0.0
      %255 = vmatprep.subr.mxu0 0.0
      %256 = vmatpush1.msra.mxu0 0.0
      %257 = vmatprep.subr.mxu0 0.0
      %258 = vmatpush1.msra.mxu0 0.0
      %259 = vmatprep.subr.mxu0 0.0
      %260 = vmatpush1.msra.mxu0 0.0
      %261 = vmatprep.subr.mxu0 0.0
      %262 = vmatpush1.msra.mxu0 0.0
      %263 = vmatprep.subr.mxu0 0.0
      %264 = vmatpush1.msra.mxu0 0.0
      %265 = vmatprep.subr.mxu0 0.0
      %266 = vmatpush1.msra.mxu0 0.0
      %267 = vmatprep.subr.mxu0 0.0
      %268 = vmatpush1.msra.mxu0 0.0
      %269 = vmatprep.subr.mxu0 0.0
      %270 = vmatpush1.msra.mxu0 0.0
      %271 = vmatprep.subr.mxu0 0.0
      %272 = vmatpush1.msra.mxu0 0.0
      %273 = vmatprep.subr.mxu0 %v241
      %274 = vmatpush1.msra.mxu0 %v239
      %275 = vmatprep.subr.mxu0 0.0
      %276 = vmatpush2.msra.mxu0 0.0
      %277 = vmatprep.subr.mxu0 0.0
      %278 = vmatpush2.msra.mxu0 0.0
      %279 = vmatprep.subr.mxu0 0.0
      %280 = vmatpush2.msra.mxu0 0.0
      %281 = vmatprep.subr.mxu0 0.0
      %282 = vmatpush2.msra.mxu0 0.0
      %283 = vmatprep.subr.mxu0 0.0
      %284 = vmatpush2.msra.mxu0 0.0
      %285 = vmatprep.subr.mxu0 0.0
      %286 = vmatpush2.msra.mxu0 0.0
      %287 = vmatprep.subr.mxu0 0.0
      %288 = vmatpush2.msra.mxu0 0.0
      %289 = vmatprep.subr.mxu0 0.0
      %290 = vmatpush2.msra.mxu0 0.0
      %291 = vmatprep.subr.mxu0 0.0
      %292 = vmatpush2.msra.mxu0 0.0
      %293 = vmatprep.subr.mxu0 0.0
      %294 = vmatpush2.msra.mxu0 0.0
      %295 = vmatprep.subr.mxu0 0.0
      %296 = vmatpush2.msra.mxu0 0.0
      %297 = vmatprep.subr.mxu0 0.0
      %298 = vmatpush2.msra.mxu0 0.0
      %299 = vmatprep.subr.mxu0 0.0
      %300 = vmatpush2.msra.mxu0 0.0
      %301 = vmatprep.subr.mxu0 0.0
      %302 = vmatpush2.msra.mxu0 0.0
      %303 = vmatprep.subr.mxu0 0.0
      %304 = vmatpush2.msra.mxu0 0.0
      %305 = vmatprep.subr.mxu0 0.0
      %306 = vmatpush2.msra.mxu0 0.0
      %307 = vmatprep.mubr.f32.mxu0 0.0
      %308 = vmatmul.mubr.f32.gmra.mxu0 %v237
      %v309 = vpop.f32.mrf.mxu0
      %v310 = vadd.f32 %v227, %v309
      %v311 = vpop.f32.mrf.mxu0
      %v312 = vadd.f32 %v231, %v311
      %313 = vdwg.mxu0
      %v314 = vadd.f32 %v310, %v312
      %315 = vadd.xlane.f32.xlu0 %v314
      %v316 = vpop.xlane.xlu0 %315
      %v317 = vrcp.pop 256.0
      %v318 = vmul.f32 %v316, %v317
      %v319 = vsub.f32 %v310, %v318
      %v320 = vsub.f32 %v312, %v318
      %v321 = vmul.f32 %v319, %v319
      %v322 = vmul.f32 %v320, %v320
      %v323 = vadd.f32 %v321, %v322
      %324 = vadd.xlane.f32.xlu0 %v323
      %v325 = vpop.xlane.xlu0 %324
      %v326 = vmul.f32 %v325, %v317
      %v327 = vadd.f32 %v326, 1e-06
      %v328 = vrsqrt.pop %v327
      %v329 = vmul.f32 %v319, %v328
      %v330 = vmul.f32 %v320, %v328
      %v332 = vlaneseq
      %v333 = vshrl.u32 %v332, 7
      %v334 = vsub.s32 0, %v333
      %v335 = vrot.slane %v219, %v334
      %v336 = vlaneseq
      %v337 = vshrl.u32 %v336, 7
      %v338 = vsub.s32 1, %v337
      %v339 = vrot.slane %v219, %v338
      %v342 = vmul.f32 %v329, %v335
      %v343 = vmul.f32 %v330, %v339
      %v345 = vlaneseq
      %v346 = vshrl.u32 %v345, 7
      %v347 = vsub.s32 0, %v346
      %v348 = vrot.slane %v221, %v347
      %v349 = vlaneseq
      %v350 = vshrl.u32 %v349, 7
      %v351 = vsub.s32 1, %v350
      %v352 = vrot.slane %v221, %v351
      %v355 = vadd.f32 %v342, %v348
      %v356 = vadd.f32 %v343, %v352
      %v357 = vld [vmem:[#allocation9] sm:$0xff]
      %v358 = vld [vmem:[#allocation9 + $0x8] sm:$0xff]
      %v359 = vld [vmem:[#allocation9 + $0x10] sm:$0xff]
      %v360 = vld [vmem:[#allocation9 + $0x18] sm:$0xff]
      %v361 = vld [vmem:[#allocation9 + $0x20] sm:$0xff]
      %v362 = vld [vmem:[#allocation9 + $0x28] sm:$0xff]
      %v363 = vld [vmem:[#allocation9 + $0x30] sm:$0xff]
      %v364 = vld [vmem:[#allocation9 + $0x38] sm:$0xff]
      %v365 = vld [vmem:[#allocation9 + $0x40] sm:$0xff]
      %v366 = vld [vmem:[#allocation9 + $0x48] sm:$0xff]
      %v367 = vld [vmem:[#allocation9 + $0x50] sm:$0xff]
      %v368 = vld [vmem:[#allocation9 + $0x58] sm:$0xff]
      %v369 = vld [vmem:[#allocation9 + $0x60] sm:$0xff]
      %v370 = vld [vmem:[#allocation9 + $0x68] sm:$0xff]
      %v371 = vld [vmem:[#allocation9 + $0x70] sm:$0xff]
      %v372 = vld [vmem:[#allocation9 + $0x78] sm:$0xff]
      %v373 = vld [vmem:[#allocation9 + $0x80] sm:$0xff]
      %v374 = vld [vmem:[#allocation9 + $0x88] sm:$0xff]
      %v375 = vld [vmem:[#allocation9 + $0x90] sm:$0xff]
      %v376 = vld [vmem:[#allocation9 + $0x98] sm:$0xff]
      %v377 = vld [vmem:[#allocation9 + $0xa0] sm:$0xff]
      %v378 = vld [vmem:[#allocation9 + $0xa8] sm:$0xff]
      %v379 = vld [vmem:[#allocation9 + $0xb0] sm:$0xff]
      %v380 = vld [vmem:[#allocation9 + $0xb8] sm:$0xff]
      %v381 = vld [vmem:[#allocation9 + $0xc0] sm:$0xff]
      %v382 = vld [vmem:[#allocation9 + $0xc8] sm:$0xff]
      %v383 = vld [vmem:[#allocation9 + $0xd0] sm:$0xff]
      %v384 = vld [vmem:[#allocation9 + $0xd8] sm:$0xff]
      %v385 = vld [vmem:[#allocation9 + $0xe0] sm:$0xff]
      %v386 = vld [vmem:[#allocation9 + $0xe8] sm:$0xff]
      %v387 = vld [vmem:[#allocation9 + $0xf0] sm:$0xff]
      %v388 = vld [vmem:[#allocation9 + $0xf8] sm:$0xff]
      %v389 = vld [vmem:[%s4] sm:$0x1]
      %v391 = vlaneseq
      %v392 = vshrl.u32 %v391, 7
      %v393 = vsub.s32 0, %v392
      %v394 = vrot.slane %v389, %v393
      %396 = vmatprep.subr.mxu0 0.0
      %397 = vmatpush1.msra.mxu0 %v372
      %398 = vmatprep.subr.mxu0 0.0
      %399 = vmatpush1.msra.mxu0 %v371
      %400 = vmatprep.subr.mxu0 0.0
      %401 = vmatpush1.msra.mxu0 %v370
      %402 = vmatprep.subr.mxu0 0.0
      %403 = vmatpush1.msra.mxu0 %v369
      %404 = vmatprep.subr.mxu0 0.0
      %405 = vmatpush1.msra.mxu0 %v368
      %406 = vmatprep.subr.mxu0 0.0
      %407 = vmatpush1.msra.mxu0 %v367
      %408 = vmatprep.subr.mxu0 0.0
      %409 = vmatpush1.msra.mxu0 %v366
      %410 = vmatprep.subr.mxu0 0.0
      %411 = vmatpush1.msra.mxu0 %v365
      %412 = vmatprep.subr.mxu0 0.0
      %413 = vmatpush1.msra.mxu0 %v364
      %414 = vmatprep.subr.mxu0 0.0
      %415 = vmatpush1.msra.mxu0 %v363
      %416 = vmatprep.subr.mxu0 0.0
      %417 = vmatpush1.msra.mxu0 %v362
      %418 = vmatprep.subr.mxu0 0.0
      %419 = vmatpush1.msra.mxu0 %v361
      %420 = vmatprep.subr.mxu0 0.0
      %421 = vmatpush1.msra.mxu0 %v360
      %422 = vmatprep.subr.mxu0 0.0
      %423 = vmatpush1.msra.mxu0 %v359
      %424 = vmatprep.subr.mxu0 0.0
      %425 = vmatpush1.msra.mxu0 %v358
      %426 = vmatprep.subr.mxu0 0.0
      %427 = vmatpush1.msra.mxu0 %v357
      %428 = vmatprep.subr.mxu0 0.0
      %429 = vmatpush2.msra.mxu0 %v388
      %430 = vmatprep.subr.mxu0 0.0
      %431 = vmatpush2.msra.mxu0 %v387
      %432 = vmatprep.subr.mxu0 0.0
      %433 = vmatpush2.msra.mxu0 %v386
      %434 = vmatprep.subr.mxu0 0.0
      %435 = vmatpush2.msra.mxu0 %v385
      %436 = vmatprep.subr.mxu0 0.0
      %437 = vmatpush2.msra.mxu0 %v384
      %438 = vmatprep.subr.mxu0 0.0
      %439 = vmatpush2.msra.mxu0 %v383
      %440 = vmatprep.subr.mxu0 0.0
      %441 = vmatpush2.msra.mxu0 %v382
      %442 = vmatprep.subr.mxu0 0.0
      %443 = vmatpush2.msra.mxu0 %v381
      %444 = vmatprep.subr.mxu0 0.0
      %445 = vmatpush2.msra.mxu0 %v380
      %446 = vmatprep.subr.mxu0 0.0
      %447 = vmatpush2.msra.mxu0 %v379
      %448 = vmatprep.subr.mxu0 0.0
      %449 = vmatpush2.msra.mxu0 %v378
      %450 = vmatprep.subr.mxu0 0.0
      %451 = vmatpush2.msra.mxu0 %v377
      %452 = vmatprep.subr.mxu0 0.0
      %453 = vmatpush2.msra.mxu0 %v376
      %454 = vmatprep.subr.mxu0 0.0
      %455 = vmatpush2.msra.mxu0 %v375
      %456 = vmatprep.subr.mxu0 0.0
      %457 = vmatpush2.msra.mxu0 %v374
      %458 = vmatprep.subr.mxu0 0.0
      %459 = vmatpush2.msra.mxu0 %v373
      %460 = vmatprep.mubr.f32.mxu0 %v356
      %461 = vmatmul.mubr.f32.gmra.mxu0 %v355
      %v462 = vpop.f32.mrf.mxu0
      %v463 = vadd.f32 %v394, %v462
      %v464 = vpop.f32.mrf.mxu0
      %465 = vdwg.mxu0
      %466 = vst [vmem:[#allocation11] sm:$0xff] %v463
    $region45: #{tpu_custom_call.1} parent=1 // pred_fallthru
      _
    // Predicated region
    $region46: #{tpu_custom_call.1} parent=1 // pred_check
      _
    $region47: #{tpu_custom_call.1} parent=1 // pred_check_branch
      %468 = sbr.rel (0) target = $region49
    $region48: #{tpu_custom_call.1} parent=1 // pred_region
      %s470 = ssub.s32 128, 128
      %471 = vsyncadd [#allocation5], %s470
      %s473 = sshll.u32 [#allocation11], 4
      %s474 = int_to_ptr.vmem [resolvable:$true] %s473
      %476 = dma.vmem_to_hbm [thread:$0]  %s474, 128, %s5, [#allocation5]
    $region49: #{tpu_custom_call.1} parent=1 // pred_fallthru
      _
    // Predicated region
    $region50: #{tpu_custom_call.1} parent=1 // pred_check
      _
    $region51: #{tpu_custom_call.1} parent=1 // pred_check_branch
      %478 = sbr.rel (0) target = $region53
    $region52: #{tpu_custom_call.1} parent=1 // pred_region
      %479 = dma.done [#allocation5], 128
    $region53: #{tpu_custom_call.1} parent=1 // pred_fallthru
      _
    %480 = vsyncpa [#allocation4], 1
    %481 = vsyncpa [#allocation7], 1
    %482 = vsyncpa [#allocation10], 1
    %483 = vsyncpa [#allocation5], 1

</llo_original>
